<compile_context>
chip_gen: v6e
topology: v6e:2x2x1
jax: 0.10.0
libtpu: 0.0.40
codegen_flags: <defaults>
</compile_context>

<pallas_src>
import functools
import numpy as np
import jax
import jax.numpy as jnp
from jax.experimental import pallas as pl
from jax.experimental.pallas import tpu as pltpu


def _round_up(x, m):
    return ((x + m - 1) // m) * m


# ----------------------------------------------------------------------------
# Fused transform + overlap-add kernel.
# One grid step == one (batch, frame-tile) pair; output block resident over frame tiles.
# ----------------------------------------------------------------------------
def _imdct_ola_kernel(x_ref, m_ref, o_ref, acc_ref, *, n_overlap, frame_tile):
    # x_ref  : (frame_tile, W)                   MDCT coefficients (W = n_fft // 2)
    # m_ref  : (n_overlap, W, hop)               transform matrix (window + 4/n_fft folded in)
    # o_ref  : (n_rows, hop)                     per-batch overlap-added output (VMEM-resident)
    # acc_ref: (frame_tile + n_overlap - 1, hop) per-tile overlap-add scratch
    t = pl.program_id(1)

    @pl.when(t == 0)
    def _init():
        o_ref[...] = jnp.zeros_like(o_ref)

    x = x_ref[...]                                                     # (TH, W)
    hop = acc_ref.shape[-1]

    # frame samples [j*hop, (j+1)*hop) for all TH frames, computed on the MXU (f32 accum)
    acc_ref[0:frame_tile, :] = jnp.dot(x, m_ref[0],
                                       preferred_element_type=jnp.float32)
    if n_overlap > 1:
        acc_ref[frame_tile:, :] = jnp.zeros((n_overlap - 1, hop), jnp.float32)
    for j in range(1, n_overlap):                  # r is small (2-4 typically): static unroll
        f = jnp.dot(x, m_ref[j], preferred_element_type=jnp.float32)   # (TH, hop)
        acc_ref[j:j + frame_tile, :] += f          # static sublane offsets, no scatter

    # single aligned dynamic-offset overlap-add into the resident per-batch output block
    rows = frame_tile + n_overlap - 1
    base = pl.multiple_of(t * frame_tile, frame_tile)
    o_ref[pl.ds(base, rows), :] += acc_ref[...]


# ----------------------------------------------------------------------------
# Module port
# ----------------------------------------------------------------------------
class IMDCT4Pallas:
    """Pallas port of models/mdct.py::IMDCT4 forward (return_frames=False path).

    PyTorch promotes to complex128/float64 through its FFT path; here the host-side
    transform matrix is built in float64 and on-device compute is float32 (or bf16
    operands with f32 accumulation when compute_dtype=jnp.bfloat16)."""

    def __init__(self, n_fft=2048, hop_length=None, win_length=None, window=None,
                 center=True, out_length=None, compute_dtype=jnp.float32,
                 frame_tile=None):
        assert hop_length is not None, "hop_length is required"
        self.n_fft = int(n_fft)
        self.hop_length = int(hop_length)
        self.center = center
        self.out_length = out_length
        self.compute_dtype = compute_dtype
        self.frame_tile = frame_tile

        if window is None:
            window = np.ones
        if callable(window):
            self.win_length = int(win_length)
            window = np.asarray(window(self.win_length), dtype=np.float64)
        else:
            window = np.asarray(window, dtype=np.float64)
            self.win_length = len(window)
        assert self.win_length <= self.n_fft
        assert self.hop_length <= self.win_length
        self.window = window

        # Exact real transform matrix of the twiddle + zero-padded FFT + real-part step:
        #   y[n] = Re( exp2[n] * sum_k exp1[k] * x[k] * exp(-2*pi*i*k*n/N) )  =>  y = x @ M
        N = self.n_fft
        k_odd = np.arange(1, N, 2, dtype=np.float64)                  # 2k+1
        exp1 = np.exp(-1j * (np.pi / (2 * N) + np.pi / 4) * k_odd)    # (N/2,)
        exp2 = np.exp(-1j * (np.pi / (2 * N)) *
                      np.arange(0, 2 * N, 2, dtype=np.float64))       # (N,)
        kk = np.arange(N // 2, dtype=np.float64)[:, None]
        nn = np.arange(N, dtype=np.float64)[None, :]
        Mfull = np.real(exp1[:, None] * exp2[None, :] *
                        np.exp(-2j * np.pi * kk * nn / N))            # (N/2, N)
        # truncate to win_length, fold in the window AND the 4/n_fft fold scale
        Mw = Mfull[:, :self.win_length] * self.window[None, :] * (4.0 / N)   # (N/2, win)

        # Zero-pad columns to a multiple of hop so overlap-add decomposes into hop chunks
        # (this also handles win_length % hop_length != 0 with zero contributions).
        r = -(-self.win_length // self.hop_length)                    # ceil(win / hop)
        self.n_overlap = r
        win_pad = r * self.hop_length
        Mw_pad = np.zeros((N // 2, win_pad), dtype=np.float64)
        Mw_pad[:, :self.win_length] = Mw
        # Msplit[j, :, p] = Mw_pad[:, j*hop + p]
        Msplit = Mw_pad.reshape(N // 2, r, self.hop_length).transpose(1, 0, 2)
        self.M = jnp.asarray(Msplit, dtype=compute_dtype)             # (r, N/2, hop)

    def __call__(self, signal):
        # TODO(synk): return_frames=True (per-frame windowed samples) is not implemented;
        # only the default return_frames=False path is ported.
        assert signal.ndim == 3, "Only BHW tensors supported"
        B, H, W = signal.shape
        assert W == self.n_fft // 2
        hop, win, r = self.hop_length, self.win_length, self.n_overlap
        out_len = (H - 1) * hop + win

        # frame-tile size: multiple of 8 sublanes, capped so the coefficient tile stays small
        th = self.frame_tile
        if th is None:
            th = min(256, _round_up(H, 8))
        th = max(8, _round_up(int(th), 8))
        H_pad = _round_up(H, th)
        n_t = H_pad // th
        n_rows = H_pad + r - 1                      # n_rows * hop >= out_len

        x = signal.astype(self.compute_dtype)
        if H_pad != H:
            # zero frames contribute zero to the overlap-add; sliced off below
            x = jnp.pad(x, ((0, 0), (0, H_pad - H), (0, 0)))

        kern = functools.partial(_imdct_ola_kernel, n_overlap=r, frame_tile=th)

        # Per-step VMEM budget: resident M + double-buffered x tile + resident output block
        # (+writeback buffer) + OLA scratch, with slack.
        esize = np.dtype(self.compute_dtype).itemsize
        need = (r * W * hop * esize               # resident transform matrix (single copy)
                + 2 * th * W * esize              # double-buffered coefficient tile
                + 2 * n_rows * hop * 4            # resident output block (+ writeback)
                + (th + r - 1) * hop * 4)         # overlap-add scratch
        vmem_limit = int(min(max(int(need * 1.3) + (4 << 20), 32 << 20), 64 << 20))

        folded = pl.pallas_call(
            kern,
            out_shape=jax.ShapeDtypeStruct((B, n_rows, hop), jnp.float32),
            grid=(B, n_t),
            in_specs=[
                pl.BlockSpec((None, th, W), lambda b, t: (b, t, 0)),
                # constant transform matrix: whole-array VMEM binding, single copy
                pl.BlockSpec(memory_space=pltpu.MemorySpace.VMEM),
            ],
            out_specs=pl.BlockSpec((None, n_rows, hop), lambda b, t: (b, 0, 0)),
            scratch_shapes=[pltpu.VMEM((th + r - 1, hop), jnp.float32)],
            compiler_params=pltpu.CompilerParams(
                dimension_semantics=("parallel", "arbitrary"),
                vmem_limit_bytes=vmem_limit,
            ),
        )(x, self.M)

        folded = folded.reshape(B, n_rows * hop)[:, :out_len]
        out = folded.reshape(B, 1, 1, out_len)
        if self.center:
            start = win // 2
            end = out_len + (-win // 2)             # matches torch's [w//2 : -w//2]
            out = out[..., start:end]
        if self.out_length is not None:
            out = out[..., :self.out_length]

        frames_out = jnp.zeros((1,), dtype=jnp.float32)   # return_frames=False path
        return out, frames_out


# ----------------------------------------------------------------------------
# Pure-numpy replica of the torch forward (complex128 path) for validation
# ----------------------------------------------------------------------------
def reference_numpy(x, n_fft, hop, win, window):
    N = n_fft
    exp1 = np.exp(-1j * (np.pi / (2 * N) + np.pi / 4) *
                  np.arange(1, N, 2, dtype=np.float64))
    exp2 = np.exp(-1j * np.pi / (2 * N) *
                  np.arange(0, 2 * N, 2, dtype=np.float64))
    sig = exp1[None, None, :] * x.astype(np.float64)
    sig = np.fft.fft(sig, n=N, axis=-1)
    sig = np.real(sig * exp2[None, None, :])
    sig = sig[..., :win] * window[None, None, :]
    B, H, _ = sig.shape
    out_len = (H - 1) * hop + win
    out = np.zeros((B, out_len), dtype=np.float64)
    for h in range(H):
        out[:, h * hop:h * hop + win] += sig[:, h, :]
    out *= 4.0 / N
    out = out[:, win // 2: out_len + (-win // 2)]
    return out.reshape(B, 1, 1, -1)


if __name__ == "__main__":
    # win % hop != 0 -> exercises the zero-padded column chunk;
    # H=40 with frame_tile=16 -> 3 frame tiles (exercises cross-tile accumulation + H padding).
    n_fft, hop, win = 32, 8, 20
    B, H = 2, 40

    # Deterministic MDCT-style sine window (shape (win_length,), per the module's __init__).
    window_fn = lambda n: np.sin(np.pi * (np.arange(n) + 0.5) / n)

    key = jax.random.PRNGKey(0)
    x = jax.random.normal(key, (B, H, n_fft // 2), dtype=jnp.float32)

    imdct = IMDCT4Pallas(n_fft=n_fft, hop_length=hop, win_length=win,
                         window=window_fn, center=True, out_length=None,
                         frame_tile=16)

    sig_out, frames = imdct(x)
    sig_out = jax.block_until_ready(sig_out)
    frames = jax.block_until_ready(frames)

    ref = reference_numpy(np.asarray(x), n_fft, hop, win, window_fn(win))
    assert sig_out.shape == ref.shape, (sig_out.shape, ref.shape)
    assert np.allclose(np.asarray(sig_out), ref, rtol=1e-3, atol=1e-3), \
        "Pallas IMDCT4 output mismatch vs reference"

    print("KERNEL_OK")
</pallas_src>

<mosaic_0001>
module attributes {stable_mosaic.version = 11 : i64} {
  func.func @_imdct_ola_kernel(%arg0: i32, %arg1: i32, %arg2: memref<1x16x16xf32, #tpu.memory_space<vmem>>, %arg3: memref<3x16x8xf32, #tpu.memory_space<vmem>>, %arg4: memref<1x50x8xf32, #tpu.memory_space<vmem>>, %arg5: memref<18x8xf32, #tpu.memory_space<vmem>>) attributes {dimension_semantics = [#tpu.dimension_semantics<parallel>, #tpu.dimension_semantics<arbitrary>], iteration_bounds = array<i64: 2, 3>, scalar_prefetch = 0 : i64, scratch_operands = 1 : i64, tpu.core_type = #tpu.core_type<tc>, window_params = [{transform_indices = @transform_0, window_bounds = array<i64: 1, 16, 16>}, {pipeline_mode = #tpu.pipeline_mode<synchronous>, transform_indices = @transform_1, window_bounds = array<i64: 3, 16, 8>}, {transform_indices = @transform_2, window_bounds = array<i64: 1, 50, 8>}]} {
    %c0_i32 = arith.constant 0 : i32
    %0 = arith.cmpi eq, %arg1, %c0_i32 : i32
    %1 = arith.extui %0 : i1 to i32
    %c0_i32_0 = arith.constant 0 : i32
    %2 = arith.cmpi ne, %1, %c0_i32_0 : i32
    scf.if %2 {
      %cst_30 = arith.constant 0.000000e+00 : f32
      %34 = vector.broadcast %cst_30 : f32 to vector<50x8xf32>
      %c0_31 = arith.constant 0 : index
      %c0_32 = arith.constant 0 : index
      %c0_33 = arith.constant 0 : index
      %35 = vector.load %arg4[%c0_31, %c0_32, %c0_33] : memref<1x50x8xf32, #tpu.memory_space<vmem>>, vector<1x50x8xf32>
      %36 = vector.shape_cast %35 : vector<1x50x8xf32> to vector<50x8xf32>
      %37 = vector.shape_cast %34 : vector<50x8xf32> to vector<1x50x8xf32>
      tpu.vector_store %arg4[%c0_31, %c0_32, %c0_33], %37 {strides = array<i32>} : memref<1x50x8xf32, #tpu.memory_space<vmem>>, vector<1x50x8xf32>,
    } else {
    }
    %c0 = arith.constant 0 : index
    %c0_1 = arith.constant 0 : index
    %c0_2 = arith.constant 0 : index
    %3 = vector.load %arg2[%c0, %c0_1, %c0_2] : memref<1x16x16xf32, #tpu.memory_space<vmem>>, vector<1x16x16xf32>
    %4 = vector.shape_cast %3 : vector<1x16x16xf32> to vector<16x16xf32>
    %c0_3 = arith.constant 0 : index
    %c0_4 = arith.constant 0 : index
    %c0_5 = arith.constant 0 : index
    %5 = vector.load %arg3[%c0_3, %c0_4, %c0_5] : memref<3x16x8xf32, #tpu.memory_space<vmem>>, vector<1x16x8xf32>
    %6 = vector.shape_cast %5 : vector<1x16x8xf32> to vector<16x8xf32>
    %cst = arith.constant dense<0.000000e+00> : vector<16x8xf32>
    %7 = tpu.matmul %4, %6, %cst {dimension_numbers = #tpu.dot_dimension_numbers<[1], [0], [0], [1], [0, 0, 1, 1], [], []>} : vector<16x16xf32>, vector<16x8xf32>, vector<16x8xf32> -> vector<16x8xf32>
    %c0_6 = arith.constant 0 : index
    %c0_7 = arith.constant 0 : index
    %8 = vector.load %arg5[%c0_6, %c0_7] : memref<18x8xf32, #tpu.memory_space<vmem>>, vector<16x8xf32>
    tpu.vector_store %arg5[%c0_6, %c0_7], %7 {strides = array<i32>} : memref<18x8xf32, #tpu.memory_space<vmem>>, vector<16x8xf32>,
    %cst_8 = arith.constant 0.000000e+00 : f32
    %9 = vector.broadcast %cst_8 : f32 to vector<2x8xf32>
    %c16 = arith.constant 16 : index
    %c0_9 = arith.constant 0 : index
    %10 = vector.load %arg5[%c16, %c0_9] : memref<18x8xf32, #tpu.memory_space<vmem>>, vector<2x8xf32>
    tpu.vector_store %arg5[%c16, %c0_9], %9 {strides = array<i32>} : memref<18x8xf32, #tpu.memory_space<vmem>>, vector<2x8xf32>,
    %c1 = arith.constant 1 : index
    %c0_10 = arith.constant 0 : index
    %c0_11 = arith.constant 0 : index
    %11 = vector.load %arg3[%c1, %c0_10, %c0_11] : memref<3x16x8xf32, #tpu.memory_space<vmem>>, vector<1x16x8xf32>
    %12 = vector.shape_cast %11 : vector<1x16x8xf32> to vector<16x8xf32>
    %cst_12 = arith.constant dense<0.000000e+00> : vector<16x8xf32>
    %13 = tpu.matmul %4, %12, %cst_12 {dimension_numbers = #tpu.dot_dimension_numbers<[1], [0], [0], [1], [0, 0, 1, 1], [], []>} : vector<16x16xf32>, vector<16x8xf32>, vector<16x8xf32> -> vector<16x8xf32>
    %c1_13 = arith.constant 1 : index
    %c0_14 = arith.constant 0 : index
    %14 = vector.load %arg5[%c1_13, %c0_14] : memref<18x8xf32, #tpu.memory_space<vmem>>, vector<16x8xf32>
    %15 = arith.addf %14, %13 : vector<16x8xf32>
    %c1_15 = arith.constant 1 : index
    %c0_16 = arith.constant 0 : index
    %16 = vector.load %arg5[%c1_15, %c0_16] : memref<18x8xf32, #tpu.memory_space<vmem>>, vector<16x8xf32>
    tpu.vector_store %arg5[%c1_15, %c0_16], %15 {strides = array<i32>} : memref<18x8xf32, #tpu.memory_space<vmem>>, vector<16x8xf32>,
    %c2 = arith.constant 2 : index
    %c0_17 = arith.constant 0 : index
    %c0_18 = arith.constant 0 : index
    %17 = vector.load %arg3[%c2, %c0_17, %c0_18] : memref<3x16x8xf32, #tpu.memory_space<vmem>>, vector<1x16x8xf32>
    %18 = vector.shape_cast %17 : vector<1x16x8xf32> to vector<16x8xf32>
    %cst_19 = arith.constant dense<0.000000e+00> : vector<16x8xf32>
    %19 = tpu.matmul %4, %18, %cst_19 {dimension_numbers = #tpu.dot_dimension_numbers<[1], [0], [0], [1], [0, 0, 1, 1], [], []>} : vector<16x16xf32>, vector<16x8xf32>, vector<16x8xf32> -> vector<16x8xf32>
    %c2_20 = arith.constant 2 : index
    %c0_21 = arith.constant 0 : index
    %20 = vector.load %arg5[%c2_20, %c0_21] : memref<18x8xf32, #tpu.memory_space<vmem>>, vector<16x8xf32>
    %21 = arith.addf %20, %19 : vector<16x8xf32>
    %c2_22 = arith.constant 2 : index
    %c0_23 = arith.constant 0 : index
    %22 = vector.load %arg5[%c2_22, %c0_23] : memref<18x8xf32, #tpu.memory_space<vmem>>, vector<16x8xf32>
    tpu.vector_store %arg5[%c2_22, %c0_23], %21 {strides = array<i32>} : memref<18x8xf32, #tpu.memory_space<vmem>>, vector<16x8xf32>,
    %c16_i32 = arith.constant 16 : i32
    %23 = arith.muli %arg1, %c16_i32 : i32
    %24 = tpu.assume_multiple %23, 16 : i32
    %c0_24 = arith.constant 0 : index
    %25 = arith.index_cast %24 : i32 to index
    %c0_25 = arith.constant 0 : index
    %26 = vector.load %arg4[%c0_24, %25, %c0_25] : memref<1x50x8xf32, #tpu.memory_space<vmem>>, vector<1x18x8xf32>
    %27 = vector.shape_cast %26 : vector<1x18x8xf32> to vector<18x8xf32>
    %c0_26 = arith.constant 0 : index
    %c0_27 = arith.constant 0 : index
    %28 = vector.load %arg5[%c0_26, %c0_27] : memref<18x8xf32, #tpu.memory_space<vmem>>, vector<18x8xf32>
    %29 = arith.addf %27, %28 : vector<18x8xf32>
    %c0_28 = arith.constant 0 : index
    %30 = arith.index_cast %24 : i32 to index
    %c0_29 = arith.constant 0 : index
    %31 = vector.load %arg4[%c0_28, %30, %c0_29] : memref<1x50x8xf32, #tpu.memory_space<vmem>>, vector<1x18x8xf32>
    %32 = vector.shape_cast %31 : vector<1x18x8xf32> to vector<18x8xf32>
    %33 = vector.shape_cast %29 : vector<18x8xf32> to vector<1x18x8xf32>
    tpu.vector_store %arg4[%c0_28, %30, %c0_29], %33 {strides = array<i32>} : memref<1x50x8xf32, #tpu.memory_space<vmem>>, vector<1x18x8xf32>,
    return
  }
  func.func @transform_0(%arg0: i32, %arg1: i32) -> (i32, i32, i32) {
    %c0_i32 = arith.constant 0 : i32
    %c0_i32_0 = arith.constant 0 : i32
    return %arg0, %arg1, %c0_i32 : i32, i32, i32
  }
  func.func @transform_1(%arg0: i32, %arg1: i32) -> (i32, i32, i32) {
    %c0_i32 = arith.constant 0 : i32
    %c0_i32_0 = arith.constant 0 : i32
    %c0_i32_1 = arith.constant 0 : i32
    %c0_i32_2 = arith.constant 0 : i32
    return %c0_i32, %c0_i32_0, %c0_i32_1 : i32, i32, i32
  }
  func.func @transform_2(%arg0: i32, %arg1: i32) -> (i32, i32, i32) {
    %c0_i32 = arith.constant 0 : i32
    %c0_i32_0 = arith.constant 0 : i32
    %c0_i32_1 = arith.constant 0 : i32
    return %arg0, %c0_i32, %c0_i32_0 : i32, i32, i32
  }
}

</mosaic_0001>

<llo_original>
// kernel: tpu_custom_call.1
$region0: #{tpu_custom_call.1}
  #allocation0 [shape = 'u32[]', space=smem, size = 0x4, offset = 0x4, fixed_abs, tag = 'smem constant byte address 0x4 - core index']
  #allocation1 [shape = 'u32[144,128]{1,0:T(1,128)}', space=vmem, size = 0x12000, scoped, tag = 'internal scratch']
  #allocation2 [shape = 'f32[18,8]{1,0:T(8,128)}', space=vmem, size = 0x3000, scoped, tag = 'scratch operand']
  %s0 = inlined_call_operand.vmem [shape: f32[2,48,16], index: 0, kind: input, shape index: {}]
  %s1 = inlined_call_operand.vmem [shape: f32[3,16,8], index: 1, kind: input, shape index: {}]
  %s2 = inlined_call_operand.vmem [shape: f32[2,50,8], index: 2, kind: output, shape index: {}]
  %s3 = sld [smem:[#allocation0]]
  $region45: #{tpu_custom_call.1} parent=0
    _
  %s5 = ssub.s32 1, %s3
  %s6 = scalar_select 0, %s5, %s3
  loop: start=0, step=1, limit=8
  $region2: #{tpu_custom_call.1} parent=0 // loop_pre_header
    _
  $region3: #{tpu_custom_call.1} parent=0 // loop_header
    %s8 = sphi 0, %s12
    %p9 = scmp.ge.s32.totalorder %s8, 8
    %s15 = sphi 0, %s27
    %s16 = sphi 0, %s23
    %s17 = sphi 0, %s15
    %s18 = sphi 0, %s16
    %s19 = sphi 0, %s17
    %s20 = sphi 0, %s18
    %s32 = sphi 0, %s34
    %s35 = sphi 0, %s32
    %s36 = sphi 0, %s35
    %s52 = sphi 0, %s36
    %s56 = sphi 0, %s56
    %s58 = sphi 0, %s56
    %s59 = sphi 0, %s58
    %s73 = sphi 0, %s59
    %s79 = sphi 0, %s81
    %s82 = sphi 0, %s79
    %s83 = sphi 0, %s82
    %s99 = sphi 0, %s83
  $region4: #{tpu_custom_call.1} parent=0 // loop_header_branch
    %11 = sbr.rel (%p9) target = $region8
  $region5: #{tpu_custom_call.1} parent=0 // loop_body
    %s13 = ssub.s32 %s8, 1
    %s14 = ssub.s32 %s8, 2
    %s21 = sadd.s32 1, %s16
    %p22 = scmp.ge.s32.totalorder %s21, 3
    %s23 = scalar_select %p22, 0, %s21
    %s24 = sadd.s32 1, %s15
    %s25 = scalar_select %p22, %s24, %s15
    %p26 = scmp.ge.s32.totalorder %s25, 2
    %s27 = scalar_select %p26, 0, %s25
    %s28 = ssub.s32 %s15, %s27
    %s29 = ssub.s32 %s16, %s23
    %s30 = sor.u32 %s28, %s29
    %p31 = scmp.eq.s32.totalorder %s30, 0
    %s33 = sadd.s32 %s32, 1
    %s34 = scalar_select %p31, %s32, %s33
    %p37 = pneg %p31
    %p38 = scmp.eq.s32.totalorder %s8, 5
    %p39 = por %p37, %p38
    %p40 = scmp.ne.s32.totalorder %s32, %s35
    %p41 = scmp.eq.s32.totalorder %s8, 0
    %p42 = por %p40, %p41
    %p43 = scmp.ne.s32.totalorder %s32, %s35
    %p44 = scmp.eq.s32.totalorder %s13, 5
    %p45 = por %p43, %p44
    %p46 = scmp.ne.s32.totalorder %s35, %s36
    %p47 = scmp.eq.s32.totalorder %s13, 0
    %p48 = por %p46, %p47
    %p49 = scmp.ne.s32.totalorder %s35, %s36
    %p50 = scmp.eq.s32.totalorder %s14, 5
    %p51 = por %p49, %p50
    %p53 = scmp.ne.s32.totalorder %s36, %s52
    %p54 = scmp.eq.s32.totalorder %s14, 0
    %p55 = por %p53, %p54
    %s57 = sadd.s32 %s56, 1
    %p60 = scmp.eq.s32.totalorder %s8, 5
    %p61 = scmp.ne.s32.totalorder %s56, %s58
    %p62 = scmp.eq.s32.totalorder %s8, 0
    %p63 = por %p61, %p62
    %p64 = scmp.ne.s32.totalorder %s56, %s58
    %p65 = scmp.eq.s32.totalorder %s13, 5
    %p66 = por %p64, %p65
    %p67 = scmp.ne.s32.totalorder %s58, %s59
    %p68 = scmp.eq.s32.totalorder %s13, 0
    %p69 = por %p67, %p68
    %p70 = scmp.ne.s32.totalorder %s58, %s59
    %p71 = scmp.eq.s32.totalorder %s14, 5
    %p72 = por %p70, %p71
    %p74 = scmp.ne.s32.totalorder %s59, %s73
    %p75 = scmp.eq.s32.totalorder %s14, 0
    %p76 = por %p74, %p75
    %s77 = ssub.s32 %s15, %s27
    %p78 = scmp.eq.s32.totalorder %s77, 0
    %s80 = sadd.s32 %s79, 1
    %s81 = scalar_select %p78, %s79, %s80
    %p84 = pneg %p78
    %p85 = scmp.eq.s32.totalorder %s8, 5
    %p86 = por %p84, %p85
    %p87 = scmp.ne.s32.totalorder %s79, %s82
    %p88 = scmp.eq.s32.totalorder %s8, 0
    %p89 = por %p87, %p88
    %p90 = scmp.ne.s32.totalorder %s79, %s82
    %p91 = scmp.eq.s32.totalorder %s13, 5
    %p92 = por %p90, %p91
    %p93 = scmp.ne.s32.totalorder %s82, %s83
    %p94 = scmp.eq.s32.totalorder %s13, 0
    %p95 = por %p93, %p94
    %p96 = scmp.ne.s32.totalorder %s82, %s83
    %p97 = scmp.eq.s32.totalorder %s14, 5
    %p98 = por %p96, %p97
    %p100 = scmp.ne.s32.totalorder %s83, %s99
    %p101 = scmp.eq.s32.totalorder %s14, 0
    %p102 = por %p100, %p101
    %p103 = scmp.le.s32.totalorder 1, %s8
    %p104 = scmp.lt.s32.totalorder %s8, 7
    %p105 = pnand %p103, %p104
    %p106 = pneg %p105
    // Predicated region
    $region9: #{tpu_custom_call.1} parent=5 // pred_check
      _
    $region10: #{tpu_custom_call.1} parent=5 // pred_check_branch
      %108 = sbr.rel (%p105) target = $region12
    $region11: #{tpu_custom_call.1} parent=5 // pred_region
      %s109 = ssub.s32 %s8, 1
      // Predicated region
      $region13: #{tpu_custom_call.1} parent=11 // pred_check
        %p110 = pneg %p69
      $region14: #{tpu_custom_call.1} parent=11 // pred_check_branch
        %112 = sbr.rel (%p110) target = $region16
      $region15: #{tpu_custom_call.1} parent=11 // pred_region
        _
      $region16: #{tpu_custom_call.1} parent=11 // pred_fallthru
        _
    $region12: #{tpu_custom_call.1} parent=5 // pred_fallthru
      _
    %p113 = scmp.lt.s32.totalorder %s8, 6
    // Predicated region
    $region17: #{tpu_custom_call.1} parent=5 // pred_check
      %p114 = pneg %p113
    $region18: #{tpu_custom_call.1} parent=5 // pred_check_branch
      %116 = sbr.rel (%p114) target = $region20
    $region19: #{tpu_custom_call.1} parent=5 // pred_region
      // Predicated region
      $region21: #{tpu_custom_call.1} parent=19 // pred_check
        %p117 = pneg %p42
      $region22: #{tpu_custom_call.1} parent=19 // pred_check_branch
        %119 = sbr.rel (%p117) target = $region24
      $region23: #{tpu_custom_call.1} parent=19 // pred_region
        %s120 = smul.u32 2, %s16
        %p121 = scmp.lt.s32.totalorder %s15, 1
        %s122 = scalar_select %p121, %s15, 1
        %p123 = scmp.lt.s32.totalorder %s120, 5
        %s124 = scalar_select %p123, %s120, 5
        %s125 = smul.addr %s122, 6
        %s126 = sadd.s32 %s124, %s125
        %s127 = smul.addr %s126, 8
        %s128 = scalar_lea.vmem %s0, %s127
        %s129 = smul.u32 2, %s16
      $region24: #{tpu_custom_call.1} parent=19 // pred_fallthru
        _
    $region20: #{tpu_custom_call.1} parent=5 // pred_fallthru
      _
    %p130 = scmp.le.s32.totalorder 1, %s8
    %p131 = scmp.lt.s32.totalorder %s8, 7
    %p132 = pnand %p130, %p131
    %p133 = pneg %p132
    // Predicated region
    $region25: #{tpu_custom_call.1} parent=5 // pred_check
      _
    $region26: #{tpu_custom_call.1} parent=5 // pred_check_branch
      %135 = sbr.rel (%p132) target = $region28
    $region27: #{tpu_custom_call.1} parent=5 // pred_region
      %s136 = ssub.s32 %s8, 1
      %s137 = smul.u32 2, %s18
      %p138 = scmp.lt.s32.totalorder %s17, 1
      %s139 = scalar_select %p138, %s17, 1
      %p140 = scmp.lt.s32.totalorder %s137, 5
      %s141 = scalar_select %p140, %s137, 5
      %s142 = smul.addr %s139, 6
      %s143 = sadd.s32 %s141, %s142
      %s144 = smul.addr %s143, 8
      %s145 = scalar_lea.vmem %s0, %s144
      %p146 = pneg %p48
      %p147 = pneg %p45
      %p148 = pneg %p69
      %p149 = pneg %p66
      %p150 = pneg %p95
      %p151 = pneg %p92
      %p152 = scmp.lt.s32.totalorder %s17, 1
      %s153 = scalar_select %p152, %s17, 1
      %s154 = smul.addr %s153, 7
      %s155 = smul.addr %s154, 8
      %s156 = scalar_lea.vmem %s2, %s155
      %s157 = smul.u32 2, %s18
      %p158 = scmp.lt.s32.totalorder %s17, 1
      %s159 = scalar_select %p158, %s17, 1
      %p160 = scmp.lt.s32.totalorder %s157, 5
      %s161 = scalar_select %p160, %s157, 5
      %s162 = smul.addr %s159, 6
      %s163 = sadd.s32 %s161, %s162
      %s164 = smul.addr %s163, 8
      %s165 = scalar_lea.vmem %s0, %s164
      %s166 = smul.u32 2, %s18
      %p167 = scmp.lt.s32.totalorder %s17, 1
      %s168 = scalar_select %p167, %s17, 1
      %s169 = smul.addr %s168, 7
      %s170 = smul.addr %s169, 8
      %s171 = scalar_lea.vmem %s2, %s170
      %p172 = scmp.eq.s32.totalorder %s18, 0
      // Predicated region
      $region29: #{tpu_custom_call.1} parent=27 // pred_check
        %p173 = pneg %p172
      $region30: #{tpu_custom_call.1} parent=27 // pred_check_branch
        %175 = sbr.rel (%p173) target = $region32
      $region31: #{tpu_custom_call.1} parent=27 // pred_region
        %vm176 = vcmask 64512
        %177 = vst.msk [vmem:[%s171] sm:$0xff] %vm176, 0.0
        %178 = vst.msk [vmem:[%s171 + $0x8] sm:$0xff] %vm176, 0.0
        %179 = vst.msk [vmem:[%s171 + $0x10] sm:$0xff] %vm176, 0.0
        %180 = vst.msk [vmem:[%s171 + $0x18] sm:$0xff] %vm176, 0.0
        %181 = vst.msk [vmem:[%s171 + $0x20] sm:$0xff] %vm176, 0.0
        %182 = vst.msk [vmem:[%s171 + $0x28] sm:$0xff] %vm176, 0.0
        %vm183 = vcmask 58368
        %184 = vst.msk [vmem:[%s171 + $0x30] sm:$0x3] %vm183, 0.0
      $region32: #{tpu_custom_call.1} parent=27 // pred_fallthru
        _
      %v185 = vld [vmem:[%s165] sm:$0xff]
      %v186 = vld [vmem:[%s165 + $0x8] sm:$0xff]
      %v187 = vld [vmem:[%s1] sm:$0xff]
      %v188 = vld [vmem:[%s1 + $0x8] sm:$0xff]
      %vm189 = vcmask 130048
      %v191 = vsel %vm189, %v185, 0
      %v194 = vsel %vm189, %v186, 0
      %196 = vmatprep.subr.mxu0 0.0
      %197 = vmatpush1.msra.mxu0 0.0
      %198 = vmatprep.subr.mxu0 0.0
      %199 = vmatpush1.msra.mxu0 0.0
      %200 = vmatprep.subr.mxu0 0.0
      %201 = vmatpush1.msra.mxu0 0.0
      %202 = vmatprep.subr.mxu0 0.0
      %203 = vmatpush1.msra.mxu0 0.0
      %204 = vmatprep.subr.mxu0 0.0
      %205 = vmatpush1.msra.mxu0 0.0
      %206 = vmatprep.subr.mxu0 0.0
      %207 = vmatpush1.msra.mxu0 0.0
      %208 = vmatprep.subr.mxu0 0.0
      %209 = vmatpush1.msra.mxu0 0.0
      %210 = vmatprep.subr.mxu0 0.0
      %211 = vmatpush1.msra.mxu0 0.0
      %212 = vmatprep.subr.mxu0 0.0
      %213 = vmatpush1.msra.mxu0 0.0
      %214 = vmatprep.subr.mxu0 0.0
      %215 = vmatpush1.msra.mxu0 0.0
      %216 = vmatprep.subr.mxu0 0.0
      %217 = vmatpush1.msra.mxu0 0.0
      %218 = vmatprep.subr.mxu0 0.0
      %219 = vmatpush1.msra.mxu0 0.0
      %220 = vmatprep.subr.mxu0 0.0
      %221 = vmatpush1.msra.mxu0 0.0
      %222 = vmatprep.subr.mxu0 0.0
      %223 = vmatpush1.msra.mxu0 0.0
      %224 = vmatprep.subr.mxu0 0.0
      %225 = vmatpush1.msra.mxu0 %v188
      %226 = vmatprep.subr.mxu0 0.0
      %227 = vmatpush1.msra.mxu0 %v187
      %228 = vmatprep.subr.mxu0 0.0
      %229 = vmatpush2.msra.mxu0 0.0
      %230 = vmatprep.subr.mxu0 0.0
      %231 = vmatpush2.msra.mxu0 0.0
      %232 = vmatprep.subr.mxu0 0.0
      %233 = vmatpush2.msra.mxu0 0.0
      %234 = vmatprep.subr.mxu0 0.0
      %235 = vmatpush2.msra.mxu0 0.0
      %236 = vmatprep.subr.mxu0 0.0
      %237 = vmatpush2.msra.mxu0 0.0
      %238 = vmatprep.subr.mxu0 0.0
      %239 = vmatpush2.msra.mxu0 0.0
      %240 = vmatprep.subr.mxu0 0.0
      %241 = vmatpush2.msra.mxu0 0.0
      %242 = vmatprep.subr.mxu0 0.0
      %243 = vmatpush2.msra.mxu0 0.0
      %244 = vmatprep.subr.mxu0 0.0
      %245 = vmatpush2.msra.mxu0 0.0
      %246 = vmatprep.subr.mxu0 0.0
      %247 = vmatpush2.msra.mxu0 0.0
      %248 = vmatprep.subr.mxu0 0.0
      %249 = vmatpush2.msra.mxu0 0.0
      %250 = vmatprep.subr.mxu0 0.0
      %251 = vmatpush2.msra.mxu0 0.0
      %252 = vmatprep.subr.mxu0 0.0
      %253 = vmatpush2.msra.mxu0 0.0
      %254 = vmatprep.subr.mxu0 0.0
      %255 = vmatpush2.msra.mxu0 0.0
      %256 = vmatprep.subr.mxu0 0.0
      %257 = vmatpush2.msra.mxu0 0.0
      %258 = vmatprep.subr.mxu0 0.0
      %259 = vmatpush2.msra.mxu0 0.0
      %260 = vmatprep.mubr.f32.mxu0 0.0
      %261 = vmatmul.mubr.f32.gmra.mxu0 %v191
      %v262 = vpop.f32.mrf.mxu0
      %v263 = vadd.f32 0.0, %v262
      %v264 = vpop.f32.mrf.mxu0
      %265 = vmatprep.mubr.f32.mxu0 0.0
      %266 = vmatmul.mubr.f32.gmra.mxu0 %v194
      %v267 = vpop.f32.mrf.mxu0
      %v268 = vadd.f32 0.0, %v267
      %v269 = vpop.f32.mrf.mxu0
      %270 = vdwg.mxu0
      %vm271 = vcmask 64512
      %272 = vst.msk [vmem:[#allocation2] sm:$0xff] %vm271, %v263
      %273 = vst.msk [vmem:[#allocation2 + $0x8] sm:$0xff] %vm271, %v268
      %vm274 = vcmask 58368
      %275 = vst.msk [vmem:[#allocation2 + $0x10] sm:$0x3] %vm274, 0.0
      %s276 = scalar_lea.vmem %s1, 16
      %v277 = vld [vmem:[%s276] sm:$0xff]
      %v278 = vld [vmem:[%s276 + $0x8] sm:$0xff]
      %279 = vmatprep.subr.mxu0 0.0
      %280 = vmatpush1.msra.mxu0 0.0
      %281 = vmatprep.subr.mxu0 0.0
      %282 = vmatpush1.msra.mxu0 0.0
      %283 = vmatprep.subr.mxu0 0.0
      %284 = vmatpush1.msra.mxu0 0.0
      %285 = vmatprep.subr.mxu0 0.0
      %286 = vmatpush1.msra.mxu0 0.0
      %287 = vmatprep.subr.mxu0 0.0
      %288 = vmatpush1.msra.mxu0 0.0
      %289 = vmatprep.subr.mxu0 0.0
      %290 = vmatpush1.msra.mxu0 0.0
      %291 = vmatprep.subr.mxu0 0.0
      %292 = vmatpush1.msra.mxu0 0.0
      %293 = vmatprep.subr.mxu0 0.0
      %294 = vmatpush1.msra.mxu0 0.0
      %295 = vmatprep.subr.mxu0 0.0
      %296 = vmatpush1.msra.mxu0 0.0
      %297 = vmatprep.subr.mxu0 0.0
      %298 = vmatpush1.msra.mxu0 0.0
      %299 = vmatprep.subr.mxu0 0.0
      %300 = vmatpush1.msra.mxu0 0.0
      %301 = vmatprep.subr.mxu0 0.0
      %302 = vmatpush1.msra.mxu0 0.0
      %303 = vmatprep.subr.mxu0 0.0
      %304 = vmatpush1.msra.mxu0 0.0
      %305 = vmatprep.subr.mxu0 0.0
      %306 = vmatpush1.msra.mxu0 0.0
      %307 = vmatprep.subr.mxu0 0.0
      %308 = vmatpush1.msra.mxu0 %v278
      %309 = vmatprep.subr.mxu0 0.0
      %310 = vmatpush1.msra.mxu0 %v277
      %311 = vmatprep.subr.mxu0 0.0
      %312 = vmatpush2.msra.mxu0 0.0
      %313 = vmatprep.subr.mxu0 0.0
      %314 = vmatpush2.msra.mxu0 0.0
      %315 = vmatprep.subr.mxu0 0.0
      %316 = vmatpush2.msra.mxu0 0.0
      %317 = vmatprep.subr.mxu0 0.0
      %318 = vmatpush2.msra.mxu0 0.0
      %319 = vmatprep.subr.mxu0 0.0
      %320 = vmatpush2.msra.mxu0 0.0
      %321 = vmatprep.subr.mxu0 0.0
      %322 = vmatpush2.msra.mxu0 0.0
      %323 = vmatprep.subr.mxu0 0.0
      %324 = vmatpush2.msra.mxu0 0.0
      %325 = vmatprep.subr.mxu0 0.0
      %326 = vmatpush2.msra.mxu0 0.0
      %327 = vmatprep.subr.mxu0 0.0
      %328 = vmatpush2.msra.mxu0 0.0
      %329 = vmatprep.subr.mxu0 0.0
      %330 = vmatpush2.msra.mxu0 0.0
      %331 = vmatprep.subr.mxu0 0.0
      %332 = vmatpush2.msra.mxu0 0.0
      %333 = vmatprep.subr.mxu0 0.0
      %334 = vmatpush2.msra.mxu0 0.0
      %335 = vmatprep.subr.mxu0 0.0
      %336 = vmatpush2.msra.mxu0 0.0
      %337 = vmatprep.subr.mxu0 0.0
      %338 = vmatpush2.msra.mxu0 0.0
      %339 = vmatprep.subr.mxu0 0.0
      %340 = vmatpush2.msra.mxu0 0.0
      %341 = vmatprep.subr.mxu0 0.0
      %342 = vmatpush2.msra.mxu0 0.0
      %343 = vmatprep.mubr.f32.mxu0 0.0
      %344 = vmatmul.mubr.f32.gmra.mxu0 %v191
      %v345 = vpop.f32.mrf.mxu0
      %v346 = vadd.f32 0.0, %v345
      %v347 = vpop.f32.mrf.mxu0
      %348 = vmatprep.mubr.f32.mxu0 0.0
      %349 = vmatmul.mubr.f32.gmra.mxu0 %v194
      %v350 = vpop.f32.mrf.mxu0
      %v351 = vadd.f32 0.0, %v350
      %v352 = vpop.f32.mrf.mxu0
      %353 = vdwg.mxu0
      %v354 = vld [vmem:[#allocation2 + $0x1] sm:$0xff]
      %v355 = vld [vmem:[#allocation2 + $0x9] sm:$0xff]
      %v356 = vadd.f32 %v354, %v346
      %v357 = vadd.f32 %v355, %v351
      %358 = vst.msk [vmem:[#allocation2 + $0x1] sm:$0xff] %vm271, %v356
      %359 = vst.msk [vmem:[#allocation2 + $0x9] sm:$0xff] %vm271, %v357
      %s360 = scalar_lea.vmem %s1, 32
      %v361 = vld [vmem:[%s360] sm:$0xff]
      %v362 = vld [vmem:[%s360 + $0x8] sm:$0xff]
      %363 = vmatprep.subr.mxu0 0.0
      %364 = vmatpush1.msra.mxu0 0.0
      %365 = vmatprep.subr.mxu0 0.0
      %366 = vmatpush1.msra.mxu0 0.0
      %367 = vmatprep.subr.mxu0 0.0
      %368 = vmatpush1.msra.mxu0 0.0
      %369 = vmatprep.subr.mxu0 0.0
      %370 = vmatpush1.msra.mxu0 0.0
      %371 = vmatprep.subr.mxu0 0.0
      %372 = vmatpush1.msra.mxu0 0.0
      %373 = vmatprep.subr.mxu0 0.0
      %374 = vmatpush1.msra.mxu0 0.0
      %375 = vmatprep.subr.mxu0 0.0
      %376 = vmatpush1.msra.mxu0 0.0
      %377 = vmatprep.subr.mxu0 0.0
      %378 = vmatpush1.msra.mxu0 0.0
      %379 = vmatprep.subr.mxu0 0.0
      %380 = vmatpush1.msra.mxu0 0.0
      %381 = vmatprep.subr.mxu0 0.0
      %382 = vmatpush1.msra.mxu0 0.0
      %383 = vmatprep.subr.mxu0 0.0
      %384 = vmatpush1.msra.mxu0 0.0
      %385 = vmatprep.subr.mxu0 0.0
      %386 = vmatpush1.msra.mxu0 0.0
      %387 = vmatprep.subr.mxu0 0.0
      %388 = vmatpush1.msra.mxu0 0.0
      %389 = vmatprep.subr.mxu0 0.0
      %390 = vmatpush1.msra.mxu0 0.0
      %391 = vmatprep.subr.mxu0 0.0
      %392 = vmatpush1.msra.mxu0 %v362
      %393 = vmatprep.subr.mxu0 0.0
      %394 = vmatpush1.msra.mxu0 %v361
      %395 = vmatprep.subr.mxu0 0.0
      %396 = vmatpush2.msra.mxu0 0.0
      %397 = vmatprep.subr.mxu0 0.0
      %398 = vmatpush2.msra.mxu0 0.0
      %399 = vmatprep.subr.mxu0 0.0
      %400 = vmatpush2.msra.mxu0 0.0
      %401 = vmatprep.subr.mxu0 0.0
      %402 = vmatpush2.msra.mxu0 0.0
      %403 = vmatprep.subr.mxu0 0.0
      %404 = vmatpush2.msra.mxu0 0.0
      %405 = vmatprep.subr.mxu0 0.0
      %406 = vmatpush2.msra.mxu0 0.0
      %407 = vmatprep.subr.mxu0 0.0
      %408 = vmatpush2.msra.mxu0 0.0
      %409 = vmatprep.subr.mxu0 0.0
      %410 = vmatpush2.msra.mxu0 0.0
      %411 = vmatprep.subr.mxu0 0.0
      %412 = vmatpush2.msra.mxu0 0.0
      %413 = vmatprep.subr.mxu0 0.0
      %414 = vmatpush2.msra.mxu0 0.0
      %415 = vmatprep.subr.mxu0 0.0
      %416 = vmatpush2.msra.mxu0 0.0
      %417 = vmatprep.subr.mxu0 0.0
      %418 = vmatpush2.msra.mxu0 0.0
      %419 = vmatprep.subr.mxu0 0.0
      %420 = vmatpush2.msra.mxu0 0.0
      %421 = vmatprep.subr.mxu0 0.0
      %422 = vmatpush2.msra.mxu0 0.0
      %423 = vmatprep.subr.mxu0 0.0
      %424 = vmatpush2.msra.mxu0 0.0
      %425 = vmatprep.subr.mxu0 0.0
      %426 = vmatpush2.msra.mxu0 0.0
      %427 = vmatprep.mubr.f32.mxu0 0.0
      %428 = vmatmul.mubr.f32.gmra.mxu0 %v191
      %v429 = vpop.f32.mrf.mxu0
      %v430 = vadd.f32 0.0, %v429
      %v431 = vpop.f32.mrf.mxu0
      %432 = vmatprep.mubr.f32.mxu0 0.0
      %433 = vmatmul.mubr.f32.gmra.mxu0 %v194
      %v434 = vpop.f32.mrf.mxu0
      %v435 = vadd.f32 0.0, %v434
      %v436 = vpop.f32.mrf.mxu0
      %437 = vdwg.mxu0
      %v438 = vld [vmem:[#allocation2 + $0x2] sm:$0xff]
      %v439 = vld [vmem:[#allocation2 + $0xa] sm:$0xff]
      %v440 = vadd.f32 %v438, %v430
      %v441 = vadd.f32 %v439, %v435
      %442 = vst.msk [vmem:[#allocation2 + $0x2] sm:$0xff] %vm271, %v440
      %443 = vst.msk [vmem:[#allocation2 + $0xa] sm:$0xff] %vm271, %v441
      %s444 = smul.u32 %s18, 16
      %s445 = scalar_lea.vmem %s171, %s444
      %v446 = vld [vmem:[%s445] sm:$0xff]
      %v447 = vld [vmem:[%s445 + $0x8] sm:$0xff]
      %v448 = vld [vmem:[%s445 + $0x10] sm:$0x3]
      %v449 = vld [vmem:[#allocation2] sm:$0xff]
      %v450 = vld [vmem:[#allocation2 + $0x8] sm:$0xff]
      %v451 = vld [vmem:[#allocation2 + $0x10] sm:$0x3]
      %v452 = vadd.f32 %v446, %v449
      %v453 = vadd.f32 %v447, %v450
      %v454 = vadd.f32 %v448, %v451
      %455 = vst.msk [vmem:[%s445] sm:$0xff] %vm271, %v452
      %456 = vst.msk [vmem:[%s445 + $0x8] sm:$0xff] %vm271, %v453
      %457 = vst.msk [vmem:[%s445 + $0x10] sm:$0x3] %vm274, %v454
      %p458 = scmp.lt.s32.totalorder %s17, 1
      %s459 = scalar_select %p458, %s17, 1
      %s460 = smul.addr %s459, 7
      %s461 = smul.addr %s460, 8
      %s462 = scalar_lea.vmem %s2, %s461
      // Predicated region
      $region33: #{tpu_custom_call.1} parent=27 // pred_check
        %p463 = pneg %p92
      $region34: #{tpu_custom_call.1} parent=27 // pred_check_branch
        %465 = sbr.rel (%p463) target = $region36
      $region35: #{tpu_custom_call.1} parent=27 // pred_region
        _
      $region36: #{tpu_custom_call.1} parent=27 // pred_fallthru
        _
    $region28: #{tpu_custom_call.1} parent=5 // pred_fallthru
      _
    %p466 = scmp.le.s32.totalorder 2, %s8
    // Predicated region
    $region37: #{tpu_custom_call.1} parent=5 // pred_check
      %p467 = pneg %p466
    $region38: #{tpu_custom_call.1} parent=5 // pred_check_branch
      %469 = sbr.rel (%p467) target = $region40
    $region39: #{tpu_custom_call.1} parent=5 // pred_region
      %s470 = ssub.s32 %s8, 2
      // Predicated region
      $region41: #{tpu_custom_call.1} parent=39 // pred_check
        %p471 = pneg %p98
      $region42: #{tpu_custom_call.1} parent=39 // pred_check_branch
        %473 = sbr.rel (%p471) target = $region44
      $region43: #{tpu_custom_call.1} parent=39 // pred_region
        %p474 = scmp.lt.s32.totalorder %s19, 1
        %s475 = scalar_select %p474, %s19, 1
        %s476 = smul.addr %s475, 7
        %s477 = smul.addr %s476, 8
        %s478 = scalar_lea.vmem %s2, %s477
      $region44: #{tpu_custom_call.1} parent=39 // pred_fallthru
        _
    $region40: #{tpu_custom_call.1} parent=5 // pred_fallthru
      _
  $region6: #{tpu_custom_call.1} parent=0 // loop_footer
    %s12 = sadd.s32 1, %s8
  $region7: #{tpu_custom_call.1} parent=0 // loop_footer_branch
    %7 = sbr.rel target = $region3
  $region8: #{tpu_custom_call.1} parent=0 // loop_exit
    _

</llo_original>
